<compile_context>
chip_gen: v7x
topology: tpu7x:2x2x1
jax: 0.10.0
libtpu: 0.0.40
codegen_flags: <defaults>
</compile_context>

<pallas_src>
import jax
import jax.numpy as jnp
from jax.experimental import pallas as pl
from jax.experimental.pallas import tpu as pltpu


def _film_kernel(cond_ref, w_ref, b_ref, x_ref, o_ref):
    # cond_ref: (1, tl, F)   condition rows for this (n, li) block, f32
    # w_ref:    (2C, 1, F)   fused Linear weight (gamma rows, then beta rows), f32, resident
    # b_ref:    (2C, 1, 1)   fused Linear bias, f32, resident
    # x_ref:    (1, C, tl, tt)
    # o_ref:    (1, C, tl, tt)
    C = x_ref.shape[1]
    cond = cond_ref[...]                                               # (1, tl, F)

    # Fused FiLM generator: single broadcast-multiply + lane-reduce over F
    # produces gamma & beta together, already laid out (2C, tl, 1) with the
    # subblock axis on sublanes and a size-1 lane dim -> broadcasts across the
    # tt lanes for free on the VPU.  Compute is tiny and hidden under the
    # block DMA (kernel is memory-bound on x).
    gb = jnp.sum(w_ref[...] * cond, axis=-1, keepdims=True) + b_ref[...]   # (2C, tl, 1)

    x = x_ref[0].astype(jnp.float32)                                   # (C, tl, tt)
    y = gb[:C] * x + gb[C:]                                            # f32 epilogue
    o_ref[0] = y.astype(o_ref.dtype)


def _tile_candidates(n, quantum, cap):
    """Divisors of n that are multiples of `quantum`, capped; n itself as fallback."""
    cands = [d for d in range(quantum, min(n, cap) + 1, quantum) if n % d == 0]
    if n <= cap or not cands:
        cands.append(n)               # full-extent block is always legal
    return sorted(set(cands))


def film_layer(x, condition, weight, bias, *, n_channels, tl=None, tt=None,
               target_block_bytes=4 * 1024 * 1024,
               vmem_limit_bytes=40 * 1024 * 1024):
    """
    x:         (N, C, L*T)  with C == n_channels (f32 or bf16/fp16 accepted)
    condition: (N, L, F)    with F == 32*subband_num
    weight:    (2C, F)      torch nn.Linear weight layout
    bias:      (2C,)
    returns:   (N, C, L*T)  in x.dtype
    """
    N, C, LT = x.shape
    Nc, L, F = condition.shape
    assert N == Nc and C == n_channels
    assert LT % L == 0, "x last dim must be subblock_num * T"
    T = LT // L
    assert weight.shape == (2 * C, F) and bias.shape == (2 * C,)

    itemsize = x.dtype.itemsize
    sub_q = 16 if itemsize == 2 else 8           # bf16 packs (16,128) tiles
    tl_cands = _tile_candidates(L, sub_q, 128)   # cap tl: bounds generator temp
    tt_cands = _tile_candidates(T, 128, T)

    # --- byte-budgeted tile selection (C-aware; review item) -----------------
    if tl is None or tt is None:
        feasible = [(C * a * b * itemsize, b, a)
                    for a in tl_cands for b in tt_cands
                    if C * a * b * itemsize <= target_block_bytes]
        if feasible:
            _, tt_pick, tl_pick = max(feasible)       # biggest block, prefer larger tt
        else:
            _, tt_pick, tl_pick = min((C * a * b * itemsize, b, a)
                                      for a in tl_cands for b in tt_cands)
        tl = tl if tl is not None else tl_pick
        tt = tt if tt is not None else tt_pick
        # v7x has 2 TensorCores: make sure at least one parallel extent is >= 2.
        if N * (L // tl) * (T // tt) < 2:
            smaller_tt = [d for d in tt_cands if d < tt]
            smaller_tl = [d for d in tl_cands if d < tl]
            if smaller_tt:
                tt = max(smaller_tt)
            elif smaller_tl:
                tl = max(smaller_tl)

    assert L % tl == 0 and (tl == L or tl % sub_q == 0), (tl, L, sub_q)
    assert T % tt == 0 and (tt == T or tt % 128 == 0), (tt, T)

    # VMEM footprint sanity: 2x double-buffered in/out x blocks + residents + temp.
    block_bytes = C * tl * tt * itemsize
    footprint = (4 * block_bytes                 # 2 in-buffers + 2 out-buffers
                 + 2 * tl * F * 4                # condition double-buffer
                 + 2 * C * F * 4 + 2 * C * 4     # resident weight + bias
                 + 2 * C * tl * F * 4)           # generator intermediate
    assert footprint <= vmem_limit_bytes, (footprint, vmem_limit_bytes)

    f32 = jnp.float32
    cond_f32 = condition.astype(f32)                       # KB-scale, free
    w3 = weight.astype(f32).reshape(2 * C, 1, F)
    b3 = bias.astype(f32).reshape(2 * C, 1, 1)
    x4 = x.reshape(N, C, L, T)                             # free reshape of the big tensor

    grid = (N, L // tl, T // tt)                           # T innermost: condition reused
    y4 = pl.pallas_call(
        _film_kernel,
        out_shape=jax.ShapeDtypeStruct((N, C, L, T), x.dtype),
        grid_spec=pltpu.PrefetchScalarGridSpec(
            num_scalar_prefetch=0,
            grid=grid,
            in_specs=[
                pl.BlockSpec((1, tl, F), lambda n, li, ti: (n, li, 0)),        # condition
                pl.BlockSpec((2 * C, 1, F), lambda n, li, ti: (0, 0, 0)),      # weight (resident)
                pl.BlockSpec((2 * C, 1, 1), lambda n, li, ti: (0, 0, 0)),      # bias (resident)
                pl.BlockSpec((1, C, tl, tt), lambda n, li, ti: (n, 0, li, ti)),  # x
            ],
            out_specs=pl.BlockSpec((1, C, tl, tt), lambda n, li, ti: (n, 0, li, ti)),
        ),
        compiler_params=pltpu.CompilerParams(
            dimension_semantics=("parallel", "parallel", "parallel"),
            vmem_limit_bytes=vmem_limit_bytes),
    )(cond_f32, w3, b3, x4)

    return y4.reshape(N, C, LT)


def _reference(x, condition, weight, bias, n_channels):
    N, C, LT = x.shape
    L = condition.shape[1]
    T = LT // L
    cond = jnp.einsum("nlf,of->nlo", condition, weight,
                      precision=jax.lax.Precision.HIGHEST) + bias       # (N, L, 2C)
    cond = jnp.transpose(cond, (0, 2, 1))                               # (N, 2C, L)
    gamma = cond[:, :n_channels, :][..., None]                          # (N, C, L, 1)
    beta = cond[:, n_channels:, :][..., None]                           # (N, C, L, 1)
    x4 = x.reshape(N, C, L, T)
    return (gamma * x4 + beta).reshape(N, C, LT)


if __name__ == "__main__":
    # Module defaults: n_channels=10, subband_num=3 -> film_gen: Linear(96, 20).
    n_channels = 10
    subband_num = 3
    F = 32 * subband_num

    key = jax.random.PRNGKey(0)
    kx, kc, kw, kb = jax.random.split(key, 4)

    def run_case(N, L, T, dtype, tl=None, tt=None, atol=1e-3, rtol=1e-3):
        x = jax.random.normal(kx, (N, n_channels, L * T), dtype=jnp.float32).astype(dtype)
        condition = jax.random.normal(kc, (N, L, F), dtype=jnp.float32)
        weight = jax.random.normal(kw, (2 * n_channels, F), dtype=jnp.float32) * (1.0 / F ** 0.5)
        bias = jax.random.normal(kb, (2 * n_channels,), dtype=jnp.float32) * 0.01

        out = film_layer(x, condition, weight, bias, n_channels=n_channels, tl=tl, tt=tt)
        out = jax.block_until_ready(out)

        ref = _reference(x.astype(jnp.float32), condition, weight, bias, n_channels)
        assert out.shape == (N, n_channels, L * T), out.shape
        assert out.dtype == x.dtype, out.dtype
        assert jnp.allclose(out.astype(jnp.float32), ref, atol=atol, rtol=rtol), \
            f"mismatch vs reference (dtype={dtype}, L={L}, T={T})"

    # 1) default shipped-size case: x (2, 10, 1024), condition (2, 8, 96)
    run_case(2, 8, 128, jnp.float32)
    # 2) multi-step grid over T (exercises tiling + condition reuse across ti)
    run_case(2, 8, 256, jnp.float32, tl=8, tt=128)
    # 3) bf16 activation path (f32 epilogue inside the kernel)
    run_case(2, 8, 128, jnp.bfloat16, atol=2e-2, rtol=2e-2)

    print("KERNEL_OK")
</pallas_src>

<mosaic_0001>
module attributes {stable_mosaic.version = 11 : i64} {
  func.func @_film_kernel(%arg0: i32, %arg1: i32, %arg2: i32, %arg3: memref<1x8x96xf32, #tpu.memory_space<vmem>>, %arg4: memref<20x1x96xf32, #tpu.memory_space<vmem>>, %arg5: memref<20x1x1xf32, #tpu.memory_space<vmem>>, %arg6: memref<1x10x8x128xf32, #tpu.memory_space<vmem>>, %arg7: memref<1x10x8x128xf32, #tpu.memory_space<vmem>>) attributes {dimension_semantics = [#tpu.dimension_semantics<parallel>, #tpu.dimension_semantics<parallel>, #tpu.dimension_semantics<parallel>], iteration_bounds = array<i64: 2, 1, 1>, scalar_prefetch = 0 : i64, scratch_operands = 0 : i64, tpu.core_type = #tpu.core_type<tc>, window_params = [{transform_indices = @transform_0, window_bounds = array<i64: 1, 8, 96>}, {pipeline_mode = #tpu.pipeline_mode<synchronous>, transform_indices = @transform_1, window_bounds = array<i64: 20, 1, 96>}, {pipeline_mode = #tpu.pipeline_mode<synchronous>, transform_indices = @transform_2, window_bounds = array<i64: 20, 1, 1>}, {transform_indices = @transform_3, window_bounds = array<i64: 1, 10, 8, 128>}, {transform_indices = @transform_4, window_bounds = array<i64: 1, 10, 8, 128>}]} {
    %c0 = arith.constant 0 : index
    %c0_0 = arith.constant 0 : index
    %c0_1 = arith.constant 0 : index
    %0 = vector.load %arg3[%c0, %c0_0, %c0_1] : memref<1x8x96xf32, #tpu.memory_space<vmem>>, vector<1x8x96xf32>
    %c0_2 = arith.constant 0 : index
    %c0_3 = arith.constant 0 : index
    %c0_4 = arith.constant 0 : index
    %1 = vector.load %arg4[%c0_2, %c0_3, %c0_4] : memref<20x1x96xf32, #tpu.memory_space<vmem>>, vector<20x1x96xf32>
    %2 = vector.broadcast %1 : vector<20x1x96xf32> to vector<20x8x96xf32>
    %3 = vector.broadcast %0 : vector<1x8x96xf32> to vector<20x8x96xf32>
    %4 = arith.mulf %2, %3 : vector<20x8x96xf32>
    %cst = arith.constant dense<0.000000e+00> : vector<20x8xf32>
    %5 = vector.multi_reduction <add>, %4, %cst [2] : vector<20x8x96xf32> to vector<20x8xf32>
    %6 = vector.shape_cast %5 : vector<20x8xf32> to vector<20x8x1xf32>
    %c0_5 = arith.constant 0 : index
    %c0_6 = arith.constant 0 : index
    %c0_7 = arith.constant 0 : index
    %7 = vector.load %arg5[%c0_5, %c0_6, %c0_7] : memref<20x1x1xf32, #tpu.memory_space<vmem>>, vector<20x1x1xf32>
    %8 = vector.broadcast %7 : vector<20x1x1xf32> to vector<20x8x1xf32>
    %9 = arith.addf %6, %8 : vector<20x8x1xf32>
    %c0_8 = arith.constant 0 : index
    %c0_9 = arith.constant 0 : index
    %c0_10 = arith.constant 0 : index
    %c0_11 = arith.constant 0 : index
    %10 = vector.load %arg6[%c0_8, %c0_9, %c0_10, %c0_11] : memref<1x10x8x128xf32, #tpu.memory_space<vmem>>, vector<1x10x8x128xf32>
    %11 = vector.shape_cast %10 : vector<1x10x8x128xf32> to vector<10x8x128xf32>
    %12 = vector.extract_strided_slice %9 {offsets = [0, 0, 0], sizes = [10, 8, 1], strides = [1, 1, 1]} : vector<20x8x1xf32> to vector<10x8x1xf32>
    %13 = vector.broadcast %12 : vector<10x8x1xf32> to vector<10x8x128xf32>
    %14 = arith.mulf %13, %11 : vector<10x8x128xf32>
    %15 = vector.extract_strided_slice %9 {offsets = [10, 0, 0], sizes = [10, 8, 1], strides = [1, 1, 1]} : vector<20x8x1xf32> to vector<10x8x1xf32>
    %16 = vector.broadcast %15 : vector<10x8x1xf32> to vector<10x8x128xf32>
    %17 = arith.addf %14, %16 : vector<10x8x128xf32>
    %c0_12 = arith.constant 0 : index
    %c0_13 = arith.constant 0 : index
    %c0_14 = arith.constant 0 : index
    %c0_15 = arith.constant 0 : index
    %18 = vector.load %arg7[%c0_12, %c0_13, %c0_14, %c0_15] : memref<1x10x8x128xf32, #tpu.memory_space<vmem>>, vector<1x10x8x128xf32>
    %19 = vector.shape_cast %18 : vector<1x10x8x128xf32> to vector<10x8x128xf32>
    %20 = vector.shape_cast %17 : vector<10x8x128xf32> to vector<1x10x8x128xf32>
    tpu.vector_store %arg7[%c0_12, %c0_13, %c0_14, %c0_15], %20 {strides = array<i32>} : memref<1x10x8x128xf32, #tpu.memory_space<vmem>>, vector<1x10x8x128xf32>,
    return
  }
  func.func @transform_0(%arg0: i32, %arg1: i32, %arg2: i32) -> (i32, i32, i32) {
    %c0_i32 = arith.constant 0 : i32
    %c0_i32_0 = arith.constant 0 : i32
    return %arg0, %arg1, %c0_i32 : i32, i32, i32
  }
  func.func @transform_1(%arg0: i32, %arg1: i32, %arg2: i32) -> (i32, i32, i32) {
    %c0_i32 = arith.constant 0 : i32
    %c0_i32_0 = arith.constant 0 : i32
    %c0_i32_1 = arith.constant 0 : i32
    %c0_i32_2 = arith.constant 0 : i32
    return %c0_i32, %c0_i32_0, %c0_i32_1 : i32, i32, i32
  }
  func.func @transform_2(%arg0: i32, %arg1: i32, %arg2: i32) -> (i32, i32, i32) {
    %c0_i32 = arith.constant 0 : i32
    %c0_i32_0 = arith.constant 0 : i32
    %c0_i32_1 = arith.constant 0 : i32
    %c0_i32_2 = arith.constant 0 : i32
    return %c0_i32, %c0_i32_0, %c0_i32_1 : i32, i32, i32
  }
  func.func @transform_3(%arg0: i32, %arg1: i32, %arg2: i32) -> (i32, i32, i32, i32) {
    %c0_i32 = arith.constant 0 : i32
    %c0_i32_0 = arith.constant 0 : i32
    return %arg0, %c0_i32, %arg1, %arg2 : i32, i32, i32, i32
  }
  func.func @transform_4(%arg0: i32, %arg1: i32, %arg2: i32) -> (i32, i32, i32, i32) {
    %c0_i32 = arith.constant 0 : i32
    %c0_i32_0 = arith.constant 0 : i32
    return %arg0, %c0_i32, %arg1, %arg2 : i32, i32, i32, i32
  }
}

</mosaic_0001>

<llo_original>
// kernel: tpu_custom_call.1
$region0: #{tpu_custom_call.1}
  #allocation0 [shape = 'u32[]', space=smem, size = 0x4, offset = 0x4, fixed_abs, tag = 'smem constant byte address 0x4 - core index']
  #allocation1 [shape = 'u32[144,128]{1,0:T(1,128)}', space=vmem, size = 0x12000, scoped, tag = 'internal scratch']
  %s0 = inlined_call_operand.hbm [shape: f32[2,8,96], index: 0, kind: input, shape index: {}]
  %s1 = inlined_call_operand.vmem [shape: f32[20,1,96], index: 1, kind: input, shape index: {}]
  %s2 = inlined_call_operand.vmem [shape: f32[20,1,1], index: 2, kind: input, shape index: {}]
  %s3 = inlined_call_operand.hbm [shape: f32[2,10,8,128], index: 3, kind: input, shape index: {}]
  %s4 = inlined_call_operand.hbm [shape: f32[2,10,8,128], index: 4, kind: output, shape index: {}]
  %s5 = sld [smem:[#allocation0]]
  $region57: #{tpu_custom_call.1} parent=0
    _
  %s7 = ssub.s32 1, %s5
  %s8 = scalar_select 0, %s7, %s5
  $region1: #{tpu_custom_call.1} parent=0
    #allocation2 [shape = 'u8[8192]{0}', space=vmem, size = 0x2000, scoped, tag = 'input window, operand 0']
    #allocation3 [shape = 's32[2]{0}', space=sflag, size = 0x8, scoped, tag = 'scoped memory for tpu_custom_call.1']
    #allocation4 [shape = 's32[2]{0}', space=sflag, size = 0x8, scoped, tag = 'scoped memory for tpu_custom_call.1']
    #allocation5 [shape = 'u8[81920]{0}', space=vmem, size = 0x14000, scoped, tag = 'input window, operand 3']
    #allocation6 [shape = 's32[2]{0}', space=sflag, size = 0x8, scoped, tag = 'scoped memory for tpu_custom_call.1']
    #allocation7 [shape = 'u8[81920]{0}', space=vmem, size = 0x14000, scoped, tag = 'output window, operand 0']
    %9 = vsyncpa [#allocation3], 0
    %s10 = scalar_lea.sflag [#allocation3], 1
    %11 = vsyncpa %s10, 0
    %12 = vsyncpa [#allocation6], 0
    %s13 = scalar_lea.sflag [#allocation6], 1
    %14 = vsyncpa %s13, 0
    %15 = vsyncpa [#allocation4], 0
    %s16 = scalar_lea.sflag [#allocation4], 1
    %17 = vsyncpa %s16, 0
    loop: start=0, step=1, limit=4
    $region2: #{tpu_custom_call.1} parent=1 // loop_pre_header
      _
    $region3: #{tpu_custom_call.1} parent=1 // loop_header
      %s19 = sphi 0, %s23
      %p20 = scmp.ge.s32.totalorder %s19, 4
      %s26 = sphi 0, %s45
      %s27 = sphi 0, %s41
      %s28 = sphi 0, %s37
      %s29 = sphi 0, %s26
      %s30 = sphi 0, %s27
      %s31 = sphi 0, %s28
      %s32 = sphi 0, %s29
      %s33 = sphi 0, %s30
      %s34 = sphi 0, %s31
      %s50 = sphi 0, %s52
      %s53 = sphi 0, %s50
      %s54 = sphi 0, %s53
      %s70 = sphi 0, %s54
      %s74 = sphi 0, %s74
      %s76 = sphi 0, %s74
      %s77 = sphi 0, %s76
      %s91 = sphi 0, %s77
      %s95 = sphi 0, %s95
      %s97 = sphi 0, %s95
      %s98 = sphi 0, %s97
      %s112 = sphi 0, %s98
      %s122 = sphi 0, %s124
      %s125 = sphi 0, %s122
      %s126 = sphi 0, %s125
      %s142 = sphi 0, %s126
      %s152 = sphi 0, %s154
      %s155 = sphi 0, %s152
      %s156 = sphi 0, %s155
      %s172 = sphi 0, %s156
    $region4: #{tpu_custom_call.1} parent=1 // loop_header_branch
      %22 = sbr.rel (%p20) target = $region8
    $region5: #{tpu_custom_call.1} parent=1 // loop_body
      %s24 = ssub.s32 %s19, 1
      %s25 = ssub.s32 %s19, 2
      %s35 = sadd.s32 1, %s28
      %p36 = scmp.ge.s32.totalorder %s35, 1
      %s37 = scalar_select %p36, 0, %s35
      %s38 = sadd.s32 1, %s27
      %s39 = scalar_select %p36, %s38, %s27
      %p40 = scmp.ge.s32.totalorder %s39, 1
      %s41 = scalar_select %p40, 0, %s39
      %s42 = sadd.s32 1, %s26
      %s43 = scalar_select %p40, %s42, %s26
      %p44 = scmp.ge.s32.totalorder %s43, 2
      %s45 = scalar_select %p44, 0, %s43
      %s46 = ssub.s32 %s26, %s45
      %s47 = ssub.s32 %s27, %s41
      %s48 = sor.u32 %s46, %s47
      %p49 = scmp.eq.s32.totalorder %s48, 0
      %s51 = sadd.s32 %s50, 1
      %s52 = scalar_select %p49, %s50, %s51
      %p55 = pneg %p49
      %p56 = scmp.eq.s32.totalorder %s19, 1
      %p57 = por %p55, %p56
      %p58 = scmp.ne.s32.totalorder %s50, %s53
      %p59 = scmp.eq.s32.totalorder %s19, 0
      %p60 = por %p58, %p59
      %p61 = scmp.ne.s32.totalorder %s50, %s53
      %p62 = scmp.eq.s32.totalorder %s24, 1
      %p63 = por %p61, %p62
      %p64 = scmp.ne.s32.totalorder %s53, %s54
      %p65 = scmp.eq.s32.totalorder %s24, 0
      %p66 = por %p64, %p65
      %p67 = scmp.ne.s32.totalorder %s53, %s54
      %p68 = scmp.eq.s32.totalorder %s25, 1
      %p69 = por %p67, %p68
      %p71 = scmp.ne.s32.totalorder %s54, %s70
      %p72 = scmp.eq.s32.totalorder %s25, 0
      %p73 = por %p71, %p72
      %s75 = sadd.s32 %s74, 1
      %p78 = scmp.eq.s32.totalorder %s19, 1
      %p79 = scmp.ne.s32.totalorder %s74, %s76
      %p80 = scmp.eq.s32.totalorder %s19, 0
      %p81 = por %p79, %p80
      %p82 = scmp.ne.s32.totalorder %s74, %s76
      %p83 = scmp.eq.s32.totalorder %s24, 1
      %p84 = por %p82, %p83
      %p85 = scmp.ne.s32.totalorder %s76, %s77
      %p86 = scmp.eq.s32.totalorder %s24, 0
      %p87 = por %p85, %p86
      %p88 = scmp.ne.s32.totalorder %s76, %s77
      %p89 = scmp.eq.s32.totalorder %s25, 1
      %p90 = por %p88, %p89
      %p92 = scmp.ne.s32.totalorder %s77, %s91
      %p93 = scmp.eq.s32.totalorder %s25, 0
      %p94 = por %p92, %p93
      %s96 = sadd.s32 %s95, 1
      %p99 = scmp.eq.s32.totalorder %s19, 1
      %p100 = scmp.ne.s32.totalorder %s95, %s97
      %p101 = scmp.eq.s32.totalorder %s19, 0
      %p102 = por %p100, %p101
      %p103 = scmp.ne.s32.totalorder %s95, %s97
      %p104 = scmp.eq.s32.totalorder %s24, 1
      %p105 = por %p103, %p104
      %p106 = scmp.ne.s32.totalorder %s97, %s98
      %p107 = scmp.eq.s32.totalorder %s24, 0
      %p108 = por %p106, %p107
      %p109 = scmp.ne.s32.totalorder %s97, %s98
      %p110 = scmp.eq.s32.totalorder %s25, 1
      %p111 = por %p109, %p110
      %p113 = scmp.ne.s32.totalorder %s98, %s112
      %p114 = scmp.eq.s32.totalorder %s25, 0
      %p115 = por %p113, %p114
      %s116 = ssub.s32 %s26, %s45
      %s117 = ssub.s32 %s27, %s41
      %s118 = sor.u32 %s116, %s117
      %s119 = ssub.s32 %s28, %s37
      %s120 = sor.u32 %s118, %s119
      %p121 = scmp.eq.s32.totalorder %s120, 0
      %s123 = sadd.s32 %s122, 1
      %s124 = scalar_select %p121, %s122, %s123
      %p127 = pneg %p121
      %p128 = scmp.eq.s32.totalorder %s19, 1
      %p129 = por %p127, %p128
      %p130 = scmp.ne.s32.totalorder %s122, %s125
      %p131 = scmp.eq.s32.totalorder %s19, 0
      %p132 = por %p130, %p131
      %p133 = scmp.ne.s32.totalorder %s122, %s125
      %p134 = scmp.eq.s32.totalorder %s24, 1
      %p135 = por %p133, %p134
      %p136 = scmp.ne.s32.totalorder %s125, %s126
      %p137 = scmp.eq.s32.totalorder %s24, 0
      %p138 = por %p136, %p137
      %p139 = scmp.ne.s32.totalorder %s125, %s126
      %p140 = scmp.eq.s32.totalorder %s25, 1
      %p141 = por %p139, %p140
      %p143 = scmp.ne.s32.totalorder %s126, %s142
      %p144 = scmp.eq.s32.totalorder %s25, 0
      %p145 = por %p143, %p144
      %s146 = ssub.s32 %s26, %s45
      %s147 = ssub.s32 %s27, %s41
      %s148 = sor.u32 %s146, %s147
      %s149 = ssub.s32 %s28, %s37
      %s150 = sor.u32 %s148, %s149
      %p151 = scmp.eq.s32.totalorder %s150, 0
      %s153 = sadd.s32 %s152, 1
      %s154 = scalar_select %p151, %s152, %s153
      %p157 = pneg %p151
      %p158 = scmp.eq.s32.totalorder %s19, 1
      %p159 = por %p157, %p158
      %p160 = scmp.ne.s32.totalorder %s152, %s155
      %p161 = scmp.eq.s32.totalorder %s19, 0
      %p162 = por %p160, %p161
      %p163 = scmp.ne.s32.totalorder %s152, %s155
      %p164 = scmp.eq.s32.totalorder %s24, 1
      %p165 = por %p163, %p164
      %p166 = scmp.ne.s32.totalorder %s155, %s156
      %p167 = scmp.eq.s32.totalorder %s24, 0
      %p168 = por %p166, %p167
      %p169 = scmp.ne.s32.totalorder %s155, %s156
      %p170 = scmp.eq.s32.totalorder %s25, 1
      %p171 = por %p169, %p170
      %p173 = scmp.ne.s32.totalorder %s156, %s172
      %p174 = scmp.eq.s32.totalorder %s25, 0
      %p175 = por %p173, %p174
      %p176 = scmp.le.s32.totalorder 1, %s19
      %p177 = scmp.lt.s32.totalorder %s19, 3
      %p178 = pnand %p176, %p177
      %p179 = pneg %p178
      // Predicated region
      $region9: #{tpu_custom_call.1} parent=5 // pred_check
        _
      $region10: #{tpu_custom_call.1} parent=5 // pred_check_branch
        %181 = sbr.rel (%p178) target = $region12
      $region11: #{tpu_custom_call.1} parent=5 // pred_region
        %s182 = ssub.s32 %s19, 1
        // Predicated region
        $region13: #{tpu_custom_call.1} parent=11 // pred_check
          %p183 = pneg %p87
        $region14: #{tpu_custom_call.1} parent=11 // pred_check_branch
          %185 = sbr.rel (%p183) target = $region16
        $region15: #{tpu_custom_call.1} parent=11 // pred_region
          _
        $region16: #{tpu_custom_call.1} parent=11 // pred_fallthru
          _
        // Predicated region
        $region17: #{tpu_custom_call.1} parent=11 // pred_check
          %p186 = pneg %p108
        $region18: #{tpu_custom_call.1} parent=11 // pred_check_branch
          %188 = sbr.rel (%p186) target = $region20
        $region19: #{tpu_custom_call.1} parent=11 // pred_region
          _
        $region20: #{tpu_custom_call.1} parent=11 // pred_fallthru
          _
      $region12: #{tpu_custom_call.1} parent=5 // pred_fallthru
        _
      %p189 = scmp.lt.s32.totalorder %s19, 2
      // Predicated region
      $region21: #{tpu_custom_call.1} parent=5 // pred_check
        %p190 = pneg %p189
      $region22: #{tpu_custom_call.1} parent=5 // pred_check_branch
        %192 = sbr.rel (%p190) target = $region24
      $region23: #{tpu_custom_call.1} parent=5 // pred_region
        // Predicated region
        $region25: #{tpu_custom_call.1} parent=23 // pred_check
          %p193 = pneg %p60
        $region26: #{tpu_custom_call.1} parent=23 // pred_check_branch
          %195 = sbr.rel (%p193) target = $region28
        $region27: #{tpu_custom_call.1} parent=23 // pred_region
          %s196 = sand.u32 %s50, 1
          %s197 = scalar_lea.sflag [#allocation3], %s196
          %s198 = sand.u32 %s50, 1
          %s199 = smul.addr %s198, 8
          %s200 = scalar_lea.vmem [#allocation2], %s199
          %s202 = ssub.s32 128, 128
          %203 = vsyncadd %s197, %s202
          %s204 = sadd.s32 %s27, %s26
          %s205 = smul.addr %s204, 128
          %s206 = scalar_lea.hbm %s0, %s205
          %s208 = sshll.u32 %s200, 4
          %s209 = int_to_ptr.vmem [resolvable:$true] %s208
          %211 = dma.hbm_to_vmem [thread:$0]  %s206, 128, %s209, %s197
        $region28: #{tpu_custom_call.1} parent=23 // pred_fallthru
          _
        // Predicated region
        $region29: #{tpu_custom_call.1} parent=23 // pred_check
          %p212 = pneg %p132
        $region30: #{tpu_custom_call.1} parent=23 // pred_check_branch
          %214 = sbr.rel (%p212) target = $region32
        $region31: #{tpu_custom_call.1} parent=23 // pred_region
          %s215 = sand.u32 %s122, 1
          %s216 = scalar_lea.sflag [#allocation6], %s215
          %s217 = sand.u32 %s122, 1
          %s218 = smul.addr %s217, 80
          %s219 = scalar_lea.vmem [#allocation5], %s218
          %s221 = ssub.s32 1280, 1280
          %222 = vsyncadd %s216, %s221
          %s223 = sadd.s32 %s28, %s27
          %s224 = smul.addr %s26, 10
          %s225 = sadd.s32 %s223, %s224
          %s226 = smul.addr %s225, 128
          %s227 = scalar_lea.hbm %s3, %s226
          %s228 = sshll.u32 %s219, 4
          %s229 = int_to_ptr.vmem [resolvable:$true] %s228
          %234 = dma.hbm_to_vmem [thread:$0]  %s227, 1280, %s229, %s216, 128, 128, 8
        $region32: #{tpu_custom_call.1} parent=23 // pred_fallthru
          _
      $region24: #{tpu_custom_call.1} parent=5 // pred_fallthru
        _
      %p235 = scmp.le.s32.totalorder 1, %s19
      %p236 = scmp.lt.s32.totalorder %s19, 3
      %p237 = pnand %p235, %p236
      %p238 = pneg %p237
      // Predicated region
      $region33: #{tpu_custom_call.1} parent=5 // pred_check
        _
      $region34: #{tpu_custom_call.1} parent=5 // pred_check_branch
        %240 = sbr.rel (%p237) target = $region36
      $region35: #{tpu_custom_call.1} parent=5 // pred_region
        %s241 = ssub.s32 %s19, 1
        %s242 = sand.u32 %s53, 1
        %s243 = scalar_lea.sflag [#allocation3], %s242
        %s244 = sand.u32 %s53, 1
        %s245 = smul.addr %s244, 8
        %s246 = scalar_lea.vmem [#allocation2], %s245
        // Predicated region
        $region37: #{tpu_custom_call.1} parent=35 // pred_check
          %p247 = pneg %p66
        $region38: #{tpu_custom_call.1} parent=35 // pred_check_branch
          %249 = sbr.rel (%p247) target = $region40
        $region39: #{tpu_custom_call.1} parent=35 // pred_region
          %250 = dma.done %s243, 128
        $region40: #{tpu_custom_call.1} parent=35 // pred_fallthru
          _
        %s251 = sand.u32 %s125, 1
        %s252 = scalar_lea.sflag [#allocation6], %s251
        %s253 = sand.u32 %s125, 1
        %s254 = smul.addr %s253, 80
        %s255 = scalar_lea.vmem [#allocation5], %s254
        // Predicated region
        $region41: #{tpu_custom_call.1} parent=35 // pred_check
          %p256 = pneg %p138
        $region42: #{tpu_custom_call.1} parent=35 // pred_check_branch
          %258 = sbr.rel (%p256) target = $region44
        $region43: #{tpu_custom_call.1} parent=35 // pred_region
          %259 = dma.done %s252, 1280
        $region44: #{tpu_custom_call.1} parent=35 // pred_fallthru
          _
        %s260 = sand.u32 %s53, 1
        %s261 = scalar_lea.sflag [#allocation3], %s260
        %s262 = sand.u32 %s53, 1
        %s263 = smul.addr %s262, 8
        %s264 = scalar_lea.vmem [#allocation2], %s263
        %p265 = pneg %p66
        %p266 = pneg %p63
        %p267 = pneg %p87
        %p268 = pneg %p84
        %p269 = pneg %p108
        %p270 = pneg %p105
        %s271 = sand.u32 %s125, 1
        %s272 = scalar_lea.sflag [#allocation6], %s271
        %s273 = sand.u32 %s125, 1
        %s274 = smul.addr %s273, 80
        %s275 = scalar_lea.vmem [#allocation5], %s274
        %p276 = pneg %p138
        %p277 = pneg %p135
        %p278 = pneg %p168
        %p279 = pneg %p165
        %s280 = sand.u32 %s155, 1
        %s281 = scalar_lea.sflag [#allocation4], %s280
        %s282 = sand.u32 %s155, 1
        %s283 = smul.addr %s282, 80
        %s284 = scalar_lea.vmem [#allocation7], %s283
        %v285 = vld [vmem:[%s246] sm:$0xff]
        %v286 = vld [vmem:[%s1] sm:$0x1]
        %v287 = vld [vmem:[%s1 + $0x1] sm:$0x1]
        %v288 = vld [vmem:[%s1 + $0x2] sm:$0x1]
        %v289 = vld [vmem:[%s1 + $0x3] sm:$0x1]
        %v290 = vld [vmem:[%s1 + $0x4] sm:$0x1]
        %v291 = vld [vmem:[%s1 + $0x5] sm:$0x1]
        %v292 = vld [vmem:[%s1 + $0x6] sm:$0x1]
        %v293 = vld [vmem:[%s1 + $0x7] sm:$0x1]
        %v294 = vld [vmem:[%s1 + $0x8] sm:$0x1]
        %v295 = vld [vmem:[%s1 + $0x9] sm:$0x1]
        %v296 = vld [vmem:[%s1 + $0xa] sm:$0x1]
        %v297 = vld [vmem:[%s1 + $0xb] sm:$0x1]
        %v298 = vld [vmem:[%s1 + $0xc] sm:$0x1]
        %v299 = vld [vmem:[%s1 + $0xd] sm:$0x1]
        %v300 = vld [vmem:[%s1 + $0xe] sm:$0x1]
        %v301 = vld [vmem:[%s1 + $0xf] sm:$0x1]
        %v302 = vld [vmem:[%s1 + $0x10] sm:$0x1]
        %v303 = vld [vmem:[%s1 + $0x11] sm:$0x1]
        %v304 = vld [vmem:[%s1 + $0x12] sm:$0x1]
        %v305 = vld [vmem:[%s1 + $0x13] sm:$0x1]
        %v326 = vlaneseq
        %v327 = vshrl.u32 %v326, 7
        %v328 = vsub.s32 0, %v327
        %v329 = vrot.slane %v286, %v328
        %v330 = vlaneseq
        %v331 = vshrl.u32 %v330, 7
        %v332 = vsub.s32 0, %v331
        %v333 = vrot.slane %v287, %v332
        %v334 = vlaneseq
        %v335 = vshrl.u32 %v334, 7
        %v336 = vsub.s32 0, %v335
        %v337 = vrot.slane %v288, %v336
        %v338 = vlaneseq
        %v339 = vshrl.u32 %v338, 7
        %v340 = vsub.s32 0, %v339
        %v341 = vrot.slane %v289, %v340
        %v342 = vlaneseq
        %v343 = vshrl.u32 %v342, 7
        %v344 = vsub.s32 0, %v343
        %v345 = vrot.slane %v290, %v344
        %v346 = vlaneseq
        %v347 = vshrl.u32 %v346, 7
        %v348 = vsub.s32 0, %v347
        %v349 = vrot.slane %v291, %v348
        %v350 = vlaneseq
        %v351 = vshrl.u32 %v350, 7
        %v352 = vsub.s32 0, %v351
        %v353 = vrot.slane %v292, %v352
        %v354 = vlaneseq
        %v355 = vshrl.u32 %v354, 7
        %v356 = vsub.s32 0, %v355
        %v357 = vrot.slane %v293, %v356
        %v358 = vlaneseq
        %v359 = vshrl.u32 %v358, 7
        %v360 = vsub.s32 0, %v359
        %v361 = vrot.slane %v294, %v360
        %v362 = vlaneseq
        %v363 = vshrl.u32 %v362, 7
        %v364 = vsub.s32 0, %v363
        %v365 = vrot.slane %v295, %v364
        %v366 = vlaneseq
        %v367 = vshrl.u32 %v366, 7
        %v368 = vsub.s32 0, %v367
        %v369 = vrot.slane %v296, %v368
        %v370 = vlaneseq
        %v371 = vshrl.u32 %v370, 7
        %v372 = vsub.s32 0, %v371
        %v373 = vrot.slane %v297, %v372
        %v374 = vlaneseq
        %v375 = vshrl.u32 %v374, 7
        %v376 = vsub.s32 0, %v375
        %v377 = vrot.slane %v298, %v376
        %v378 = vlaneseq
        %v379 = vshrl.u32 %v378, 7
        %v380 = vsub.s32 0, %v379
        %v381 = vrot.slane %v299, %v380
        %v382 = vlaneseq
        %v383 = vshrl.u32 %v382, 7
        %v384 = vsub.s32 0, %v383
        %v385 = vrot.slane %v300, %v384
        %v386 = vlaneseq
        %v387 = vshrl.u32 %v386, 7
        %v388 = vsub.s32 0, %v387
        %v389 = vrot.slane %v301, %v388
        %v390 = vlaneseq
        %v391 = vshrl.u32 %v390, 7
        %v392 = vsub.s32 0, %v391
        %v393 = vrot.slane %v302, %v392
        %v394 = vlaneseq
        %v395 = vshrl.u32 %v394, 7
        %v396 = vsub.s32 0, %v395
        %v397 = vrot.slane %v303, %v396
        %v398 = vlaneseq
        %v399 = vshrl.u32 %v398, 7
        %v400 = vsub.s32 0, %v399
        %v401 = vrot.slane %v304, %v400
        %v402 = vlaneseq
        %v403 = vshrl.u32 %v402, 7
        %v404 = vsub.s32 0, %v403
        %v405 = vrot.slane %v305, %v404
        %v426 = vmul.f32 %v329, %v285
        %v427 = vmul.f32 %v333, %v285
        %v428 = vmul.f32 %v337, %v285
        %v429 = vmul.f32 %v341, %v285
        %v430 = vmul.f32 %v345, %v285
        %v431 = vmul.f32 %v349, %v285
        %v432 = vmul.f32 %v353, %v285
        %v433 = vmul.f32 %v357, %v285
        %v434 = vmul.f32 %v361, %v285
        %v435 = vmul.f32 %v365, %v285
        %v436 = vmul.f32 %v369, %v285
        %v437 = vmul.f32 %v373, %v285
        %v438 = vmul.f32 %v377, %v285
        %v439 = vmul.f32 %v381, %v285
        %v440 = vmul.f32 %v385, %v285
        %v441 = vmul.f32 %v389, %v285
        %v442 = vmul.f32 %v393, %v285
        %v443 = vmul.f32 %v397, %v285
        %v444 = vmul.f32 %v401, %v285
        %v445 = vmul.f32 %v405, %v285
        %vm446 = vcmask 785408
        %v447 = vsel %vm446, %v426, 0.0
        %448 = vadd.xlane.f32.xlu0 %v447
        %v449 = vpop.xlane.xlu0 %448
        %v450 = vsel %vm446, %v427, 0.0
        %451 = vadd.xlane.f32.xlu0 %v450
        %v452 = vpop.xlane.xlu0 %451
        %v453 = vsel %vm446, %v428, 0.0
        %454 = vadd.xlane.f32.xlu0 %v453
        %v455 = vpop.xlane.xlu0 %454
        %v456 = vsel %vm446, %v429, 0.0
        %457 = vadd.xlane.f32.xlu0 %v456
        %v458 = vpop.xlane.xlu0 %457
        %v459 = vsel %vm446, %v430, 0.0
        %460 = vadd.xlane.f32.xlu0 %v459
        %v461 = vpop.xlane.xlu0 %460
        %v462 = vsel %vm446, %v431, 0.0
        %463 = vadd.xlane.f32.xlu0 %v462
        %v464 = vpop.xlane.xlu0 %463
        %v465 = vsel %vm446, %v432, 0.0
        %466 = vadd.xlane.f32.xlu0 %v465
        %v467 = vpop.xlane.xlu0 %466
        %v468 = vsel %vm446, %v433, 0.0
        %469 = vadd.xlane.f32.xlu0 %v468
        %v470 = vpop.xlane.xlu0 %469
        %v471 = vsel %vm446, %v434, 0.0
        %472 = vadd.xlane.f32.xlu0 %v471
        %v473 = vpop.xlane.xlu0 %472
        %v474 = vsel %vm446, %v435, 0.0
        %475 = vadd.xlane.f32.xlu0 %v474
        %v476 = vpop.xlane.xlu0 %475
        %v477 = vsel %vm446, %v436, 0.0
        %478 = vadd.xlane.f32.xlu0 %v477
        %v479 = vpop.xlane.xlu0 %478
        %v480 = vsel %vm446, %v437, 0.0
        %481 = vadd.xlane.f32.xlu0 %v480
        %v482 = vpop.xlane.xlu0 %481
        %v483 = vsel %vm446, %v438, 0.0
        %484 = vadd.xlane.f32.xlu0 %v483
        %v485 = vpop.xlane.xlu0 %484
        %v486 = vsel %vm446, %v439, 0.0
        %487 = vadd.xlane.f32.xlu0 %v486
        %v488 = vpop.xlane.xlu0 %487
        %v489 = vsel %vm446, %v440, 0.0
        %490 = vadd.xlane.f32.xlu0 %v489
        %v491 = vpop.xlane.xlu0 %490
        %v492 = vsel %vm446, %v441, 0.0
        %493 = vadd.xlane.f32.xlu0 %v492
        %v494 = vpop.xlane.xlu0 %493
        %v495 = vsel %vm446, %v442, 0.0
        %496 = vadd.xlane.f32.xlu0 %v495
        %v497 = vpop.xlane.xlu0 %496
        %v498 = vsel %vm446, %v443, 0.0
        %499 = vadd.xlane.f32.xlu0 %v498
        %v500 = vpop.xlane.xlu0 %499
        %v501 = vsel %vm446, %v444, 0.0
        %502 = vadd.xlane.f32.xlu0 %v501
        %v503 = vpop.xlane.xlu0 %502
        %v504 = vsel %vm446, %v445, 0.0
        %505 = vadd.xlane.f32.xlu0 %v504
        %v506 = vpop.xlane.xlu0 %505
        %v507 = vld [vmem:[%s2] sm:$0x1]
        %v508 = vld [vmem:[%s2 + $0x1] sm:$0x1]
        %v509 = vld [vmem:[%s2 + $0x2] sm:$0x1]
        %v510 = vld [vmem:[%s2 + $0x3] sm:$0x1]
        %v511 = vld [vmem:[%s2 + $0x4] sm:$0x1]
        %v512 = vld [vmem:[%s2 + $0x5] sm:$0x1]
        %v513 = vld [vmem:[%s2 + $0x6] sm:$0x1]
        %v514 = vld [vmem:[%s2 + $0x7] sm:$0x1]
        %v515 = vld [vmem:[%s2 + $0x8] sm:$0x1]
        %v516 = vld [vmem:[%s2 + $0x9] sm:$0x1]
        %v517 = vld [vmem:[%s2 + $0xa] sm:$0x1]
        %v518 = vld [vmem:[%s2 + $0xb] sm:$0x1]
        %v519 = vld [vmem:[%s2 + $0xc] sm:$0x1]
        %v520 = vld [vmem:[%s2 + $0xd] sm:$0x1]
        %v521 = vld [vmem:[%s2 + $0xe] sm:$0x1]
        %v522 = vld [vmem:[%s2 + $0xf] sm:$0x1]
        %v523 = vld [vmem:[%s2 + $0x10] sm:$0x1]
        %v524 = vld [vmem:[%s2 + $0x11] sm:$0x1]
        %v525 = vld [vmem:[%s2 + $0x12] sm:$0x1]
        %v526 = vld [vmem:[%s2 + $0x13] sm:$0x1]
        %v547 = vlaneseq
        %v548 = vshrl.u32 %v547, 7
        %v549 = vsub.s32 0, %v548
        %v550 = vrot.slane %v507, %v549
        %v551 = vlaneseq
        %v552 = vshrl.u32 %v551, 7
        %v553 = vsub.s32 0, %v552
        %v554 = vrot.slane %v508, %v553
        %v555 = vlaneseq
        %v556 = vshrl.u32 %v555, 7
        %v557 = vsub.s32 0, %v556
        %v558 = vrot.slane %v509, %v557
        %v559 = vlaneseq
        %v560 = vshrl.u32 %v559, 7
        %v561 = vsub.s32 0, %v560
        %v562 = vrot.slane %v510, %v561
        %v563 = vlaneseq
        %v564 = vshrl.u32 %v563, 7
        %v565 = vsub.s32 0, %v564
        %v566 = vrot.slane %v511, %v565
        %v567 = vlaneseq
        %v568 = vshrl.u32 %v567, 7
        %v569 = vsub.s32 0, %v568
        %v570 = vrot.slane %v512, %v569
        %v571 = vlaneseq
        %v572 = vshrl.u32 %v571, 7
        %v573 = vsub.s32 0, %v572
        %v574 = vrot.slane %v513, %v573
        %v575 = vlaneseq
        %v576 = vshrl.u32 %v575, 7
        %v577 = vsub.s32 0, %v576
        %v578 = vrot.slane %v514, %v577
        %v579 = vlaneseq
        %v580 = vshrl.u32 %v579, 7
        %v581 = vsub.s32 0, %v580
        %v582 = vrot.slane %v515, %v581
        %v583 = vlaneseq
        %v584 = vshrl.u32 %v583, 7
        %v585 = vsub.s32 0, %v584
        %v586 = vrot.slane %v516, %v585
        %v587 = vlaneseq
        %v588 = vshrl.u32 %v587, 7
        %v589 = vsub.s32 0, %v588
        %v590 = vrot.slane %v517, %v589
        %v591 = vlaneseq
        %v592 = vshrl.u32 %v591, 7
        %v593 = vsub.s32 0, %v592
        %v594 = vrot.slane %v518, %v593
        %v595 = vlaneseq
        %v596 = vshrl.u32 %v595, 7
        %v597 = vsub.s32 0, %v596
        %v598 = vrot.slane %v519, %v597
        %v599 = vlaneseq
        %v600 = vshrl.u32 %v599, 7
        %v601 = vsub.s32 0, %v600
        %v602 = vrot.slane %v520, %v601
        %v603 = vlaneseq
        %v604 = vshrl.u32 %v603, 7
        %v605 = vsub.s32 0, %v604
        %v606 = vrot.slane %v521, %v605
        %v607 = vlaneseq
        %v608 = vshrl.u32 %v607, 7
        %v609 = vsub.s32 0, %v608
        %v610 = vrot.slane %v522, %v609
        %v611 = vlaneseq
        %v612 = vshrl.u32 %v611, 7
        %v613 = vsub.s32 0, %v612
        %v614 = vrot.slane %v523, %v613
        %v615 = vlaneseq
        %v616 = vshrl.u32 %v615, 7
        %v617 = vsub.s32 0, %v616
        %v618 = vrot.slane %v524, %v617
        %v619 = vlaneseq
        %v620 = vshrl.u32 %v619, 7
        %v621 = vsub.s32 0, %v620
        %v622 = vrot.slane %v525, %v621
        %v623 = vlaneseq
        %v624 = vshrl.u32 %v623, 7
        %v625 = vsub.s32 0, %v624
        %v626 = vrot.slane %v526, %v625
        %v647 = vadd.f32 %v449, %v550
        %v648 = vadd.f32 %v452, %v554
        %v649 = vadd.f32 %v455, %v558
        %v650 = vadd.f32 %v458, %v562
        %v651 = vadd.f32 %v461, %v566
        %v652 = vadd.f32 %v464, %v570
        %v653 = vadd.f32 %v467, %v574
        %v654 = vadd.f32 %v470, %v578
        %v655 = vadd.f32 %v473, %v582
        %v656 = vadd.f32 %v476, %v586
        %v657 = vadd.f32 %v479, %v590
        %v658 = vadd.f32 %v482, %v594
        %v659 = vadd.f32 %v485, %v598
        %v660 = vadd.f32 %v488, %v602
        %v661 = vadd.f32 %v491, %v606
        %v662 = vadd.f32 %v494, %v610
        %v663 = vadd.f32 %v497, %v614
        %v664 = vadd.f32 %v500, %v618
        %v665 = vadd.f32 %v503, %v622
        %v666 = vadd.f32 %v506, %v626
        %v667 = vld [vmem:[%s255] sm:$0xff]
        %v668 = vld [vmem:[%s255 + $0x8] sm:$0xff]
        %v669 = vld [vmem:[%s255 + $0x10] sm:$0xff]
        %v670 = vld [vmem:[%s255 + $0x18] sm:$0xff]
        %v671 = vld [vmem:[%s255 + $0x20] sm:$0xff]
        %v672 = vld [vmem:[%s255 + $0x28] sm:$0xff]
        %v673 = vld [vmem:[%s255 + $0x30] sm:$0xff]
        %v674 = vld [vmem:[%s255 + $0x38] sm:$0xff]
        %v675 = vld [vmem:[%s255 + $0x40] sm:$0xff]
        %v676 = vld [vmem:[%s255 + $0x48] sm:$0xff]
        %678 = vset.pattern.permute.xlu0 0
        %679 = vperm.xlu0 %678, %v647
        %v680 = vpop.permute.xlu0 %679
        %683 = vset.pattern.permute.xlu0 0
        %684 = vperm.xlu0 %683, %v648
        %v685 = vpop.permute.xlu0 %684
        %688 = vset.pattern.permute.xlu0 0
        %689 = vperm.xlu0 %688, %v649
        %v690 = vpop.permute.xlu0 %689
        %693 = vset.pattern.permute.xlu0 0
        %694 = vperm.xlu0 %693, %v650
        %v695 = vpop.permute.xlu0 %694
        %698 = vset.pattern.permute.xlu0 0
        %699 = vperm.xlu0 %698, %v651
        %v700 = vpop.permute.xlu0 %699
        %703 = vset.pattern.permute.xlu0 0
        %704 = vperm.xlu0 %703, %v652
        %v705 = vpop.permute.xlu0 %704
        %708 = vset.pattern.permute.xlu0 0
        %709 = vperm.xlu0 %708, %v653
        %v710 = vpop.permute.xlu0 %709
        %713 = vset.pattern.permute.xlu0 0
        %714 = vperm.xlu0 %713, %v654
        %v715 = vpop.permute.xlu0 %714
        %718 = vset.pattern.permute.xlu0 0
        %719 = vperm.xlu0 %718, %v655
        %v720 = vpop.permute.xlu0 %719
        %723 = vset.pattern.permute.xlu0 0
        %724 = vperm.xlu0 %723, %v656
        %v725 = vpop.permute.xlu0 %724
        %v727 = vmul.f32 %v680, %v667
        %v728 = vmul.f32 %v685, %v668
        %v729 = vmul.f32 %v690, %v669
        %v730 = vmul.f32 %v695, %v670
        %v731 = vmul.f32 %v700, %v671
        %v732 = vmul.f32 %v705, %v672
        %v733 = vmul.f32 %v710, %v673
        %v734 = vmul.f32 %v715, %v674
        %v735 = vmul.f32 %v720, %v675
        %v736 = vmul.f32 %v725, %v676
        %738 = vset.pattern.permute.xlu0 0
        %739 = vperm.xlu0 %738, %v657
        %v740 = vpop.permute.xlu0 %739
        %743 = vset.pattern.permute.xlu0 0
        %744 = vperm.xlu0 %743, %v658
        %v745 = vpop.permute.xlu0 %744
        %748 = vset.pattern.permute.xlu0 0
        %749 = vperm.xlu0 %748, %v659
        %v750 = vpop.permute.xlu0 %749
        %753 = vset.pattern.permute.xlu0 0
        %754 = vperm.xlu0 %753, %v660
        %v755 = vpop.permute.xlu0 %754
        %758 = vset.pattern.permute.xlu0 0
        %759 = vperm.xlu0 %758, %v661
        %v760 = vpop.permute.xlu0 %759
        %763 = vset.pattern.permute.xlu0 0
        %764 = vperm.xlu0 %763, %v662
        %v765 = vpop.permute.xlu0 %764
        %768 = vset.pattern.permute.xlu0 0
        %769 = vperm.xlu0 %768, %v663
        %v770 = vpop.permute.xlu0 %769
        %773 = vset.pattern.permute.xlu0 0
        %774 = vperm.xlu0 %773, %v664
        %v775 = vpop.permute.xlu0 %774
        %778 = vset.pattern.permute.xlu0 0
        %779 = vperm.xlu0 %778, %v665
        %v780 = vpop.permute.xlu0 %779
        %783 = vset.pattern.permute.xlu0 0
        %784 = vperm.xlu0 %783, %v666
        %v785 = vpop.permute.xlu0 %784
        %v787 = vadd.f32 %v727, %v740
        %v788 = vadd.f32 %v728, %v745
        %v789 = vadd.f32 %v729, %v750
        %v790 = vadd.f32 %v730, %v755
        %v791 = vadd.f32 %v731, %v760
        %v792 = vadd.f32 %v732, %v765
        %v793 = vadd.f32 %v733, %v770
        %v794 = vadd.f32 %v734, %v775
        %v795 = vadd.f32 %v735, %v780
        %v796 = vadd.f32 %v736, %v785
        %797 = vst [vmem:[%s284] sm:$0xff] %v787
        %798 = vst [vmem:[%s284 + $0x8] sm:$0xff] %v788
        %799 = vst [vmem:[%s284 + $0x10] sm:$0xff] %v789
        %800 = vst [vmem:[%s284 + $0x18] sm:$0xff] %v790
        %801 = vst [vmem:[%s284 + $0x20] sm:$0xff] %v791
        %802 = vst [vmem:[%s284 + $0x28] sm:$0xff] %v792
        %803 = vst [vmem:[%s284 + $0x30] sm:$0xff] %v793
        %804 = vst [vmem:[%s284 + $0x38] sm:$0xff] %v794
        %805 = vst [vmem:[%s284 + $0x40] sm:$0xff] %v795
        %806 = vst [vmem:[%s284 + $0x48] sm:$0xff] %v796
        %s807 = sand.u32 %s155, 1
        %s808 = scalar_lea.sflag [#allocation4], %s807
        %s809 = sand.u32 %s155, 1
        %s810 = smul.addr %s809, 80
        %s811 = scalar_lea.vmem [#allocation7], %s810
        // Predicated region
        $region45: #{tpu_custom_call.1} parent=35 // pred_check
          %p812 = pneg %p165
        $region46: #{tpu_custom_call.1} parent=35 // pred_check_branch
          %814 = sbr.rel (%p812) target = $region48
        $region47: #{tpu_custom_call.1} parent=35 // pred_region
          %s816 = ssub.s32 1280, 1280
          %817 = vsyncadd %s808, %s816
          %s818 = sadd.s32 %s31, %s30
          %s819 = smul.addr %s29, 10
          %s820 = sadd.s32 %s818, %s819
          %s821 = smul.addr %s820, 128
          %s822 = scalar_lea.hbm %s4, %s821
          %s823 = sshll.u32 %s811, 4
          %s824 = int_to_ptr.vmem [resolvable:$true] %s823
          %829 = dma.vmem_to_hbm [thread:$0]  %s824, 1280, %s822, %s808, 128, 128, 8
        $region48: #{tpu_custom_call.1} parent=35 // pred_fallthru
          _
      $region36: #{tpu_custom_call.1} parent=5 // pred_fallthru
        _
      %p830 = scmp.le.s32.totalorder 2, %s19
      // Predicated region
      $region49: #{tpu_custom_call.1} parent=5 // pred_check
        %p831 = pneg %p830
      $region50: #{tpu_custom_call.1} parent=5 // pred_check_branch
        %833 = sbr.rel (%p831) target = $region52
      $region51: #{tpu_custom_call.1} parent=5 // pred_region
        %s834 = ssub.s32 %s19, 2
        // Predicated region
        $region53: #{tpu_custom_call.1} parent=51 // pred_check
          %p835 = pneg %p171
        $region54: #{tpu_custom_call.1} parent=51 // pred_check_branch
          %837 = sbr.rel (%p835) target = $region56
        $region55: #{tpu_custom_call.1} parent=51 // pred_region
          %s838 = sand.u32 %s156, 1
          %s839 = scalar_lea.sflag [#allocation4], %s838
          %s840 = sand.u32 %s156, 1
          %s841 = smul.addr %s840, 80
          %s842 = scalar_lea.vmem [#allocation7], %s841
          %843 = dma.done %s839, 1280
        $region56: #{tpu_custom_call.1} parent=51 // pred_fallthru
          _
      $region52: #{tpu_custom_call.1} parent=5 // pred_fallthru
        _
    $region6: #{tpu_custom_call.1} parent=1 // loop_footer
      %s23 = sadd.s32 1, %s19
    $region7: #{tpu_custom_call.1} parent=1 // loop_footer_branch
      %18 = sbr.rel target = $region3
    $region8: #{tpu_custom_call.1} parent=1 // loop_exit
      _
    %844 = vsyncpa [#allocation3], 1
    %s845 = scalar_lea.sflag [#allocation3], 1
    %846 = vsyncpa %s845, 1
    %847 = vsyncpa [#allocation6], 1
    %s848 = scalar_lea.sflag [#allocation6], 1
    %849 = vsyncpa %s848, 1
    %850 = vsyncpa [#allocation4], 1
    %s851 = scalar_lea.sflag [#allocation4], 1
    %852 = vsyncpa %s851, 1

</llo_original>
